<compile_context>
chip_gen: v6e
topology: v6e:2x2x1
jax: 0.10.0
libtpu: 0.0.40
codegen_flags: <defaults>
</compile_context>

<pallas_src>
import functools

import jax
import jax.numpy as jnp
from jax import lax
from jax.experimental import pallas as pl
from jax.experimental.pallas import tpu as pltpu


# --------------------------------------------------------------------------- #
# Tiling helpers
# --------------------------------------------------------------------------- #
def _round_up(x, m):
    return ((x + m - 1) // m) * m


def _choose_tile(c, hw, itemsize, per_buffer_budget=8 * 1024 * 1024,
                 min_steps_per_core=2):
    """Lane tile TK (multiple of 128) for the HW contraction axis.

    Largest TK such that one (C, TK) input tile stays within per_buffer_budget
    (8 MiB; double-buffered total stays well under v6e/v7x's 32 MiB scoped
    default, and an explicit vmem_limit_bytes covers v5e's 16 MiB default),
    while targeting at least `min_steps_per_core` grid steps per TensorCore so
    BlockSpec double-buffering can overlap the DMA of tile k+1 with the MXU
    work on tile k.
    """
    hw128 = _round_up(hw, 128)
    budget_tk = max(128, (per_buffer_budget // max(1, c * itemsize)) // 128 * 128)
    target_tk = max(128, _round_up(pl.cdiv(hw, 2 * min_steps_per_core), 128))
    return min(budget_tk, target_tk, hw128)


# --------------------------------------------------------------------------- #
# Kernel 1: per-TensorCore partial gram  G_p = X_p @ X_p^T  (streamed over HW)
# --------------------------------------------------------------------------- #
def _partial_gram_kernel(x_ref, g_ref, *, hw, tk, nk_half, apply_mask):
    p = pl.program_id(0)   # HW half (parallel -> one per TensorCore on v7x)
    k = pl.program_id(1)   # reduction step within this half (arbitrary)

    @pl.when(k == 0)
    def _():
        g_ref[...] = jnp.zeros_like(g_ref)

    x = x_ref[...]
    if apply_mask:
        # Zero lanes past the end of HW: covers the ragged last tile and the
        # clamped duplicate tile a core receives when the tile count is odd.
        col0 = (p * nk_half + k) * tk
        lane = lax.broadcasted_iota(jnp.int32, x.shape, 1)
        x = jnp.where(lane + col0 < hw, x, jnp.zeros_like(x))

    # X_tile @ X_tile^T without materializing the transpose; f32 MXU accumulate
    # directly into the resident output block.
    g_ref[...] += lax.dot_general(
        x, x, (((1,), (1,)), ((), ())), preferred_element_type=jnp.float32
    )


def _partial_grams(x2d):
    """(2, C, C) partial grams of a (C, HW) slab; their sum is X @ X^T."""
    c, hw = x2d.shape
    itemsize = x2d.dtype.itemsize
    tk = _choose_tile(c, hw, itemsize)
    nk_total = pl.cdiv(hw, tk)
    nk_half = pl.cdiv(nk_total, 2)
    # Static decision: mask only if the last tile is ragged or the tile count
    # is odd (one core then re-reads a clamped duplicate tile, masked to zero).
    apply_mask = (hw % tk != 0) or (nk_total % 2 != 0)

    def x_index_map(p, k):
        # Clamp so the DMA never sees an out-of-range block index.
        return (0, jnp.minimum(p * nk_half + k, nk_total - 1))

    kernel = functools.partial(
        _partial_gram_kernel, hw=hw, tk=tk, nk_half=nk_half, apply_mask=apply_mask)

    # 2 double-buffered bf16 input tiles + the two f32 gram blocks + headroom.
    vmem_limit = int(2 * c * tk * itemsize + 2 * c * c * 4 + (8 << 20))

    return pl.pallas_call(
        kernel,
        out_shape=jax.ShapeDtypeStruct((2, c, c), jnp.float32),
        grid=(2, nk_half),
        in_specs=[pl.BlockSpec((c, tk), x_index_map)],
        out_specs=pl.BlockSpec((None, c, c), lambda p, k: (p, 0, 0)),
        compiler_params=pltpu.CompilerParams(
            dimension_semantics=("parallel", "arbitrary"),
            vmem_limit_bytes=vmem_limit,
        ),
        cost_estimate=pl.CostEstimate(
            flops=2 * c * c * hw,
            transcendentals=0,
            bytes_accessed=c * hw * itemsize + 2 * c * c * 4,
        ),
    )(x2d)


def gram_matrix_pallas(x2d):
    """Full gram matrix (used once per style layer in __init__)."""
    partial = _partial_grams(x2d)
    return partial[0] + partial[1]   # tiny (C, C) add, off the training step


# --------------------------------------------------------------------------- #
# Kernel 2: epilogue — loss = scale * sum((G0 + G1 - S)^2), scalar in SMEM
# --------------------------------------------------------------------------- #
def _combine_loss_kernel(g_ref, s_ref, o_ref, *, scale):
    d = (g_ref[0] + g_ref[1]) - s_ref[...]
    o_ref[0] = scale * jnp.sum(d * d)


def _combine_loss(partial_grams, style_gram, scale):
    c = style_gram.shape[0]
    out = pl.pallas_call(
        functools.partial(_combine_loss_kernel, scale=scale),
        out_shape=jax.ShapeDtypeStruct((1,), jnp.float32),
        in_specs=[
            pl.BlockSpec(memory_space=pltpu.MemorySpace.VMEM),
            pl.BlockSpec(memory_space=pltpu.MemorySpace.VMEM),
        ],
        out_specs=pl.BlockSpec(memory_space=pltpu.MemorySpace.SMEM),
        cost_estimate=pl.CostEstimate(
            flops=4 * c * c,
            transcendentals=0,
            bytes_accessed=3 * c * c * 4 + 4,
        ),
    )(partial_grams, style_gram)
    return out[0]


# --------------------------------------------------------------------------- #
# Per-layer style loss against a precomputed style gram S (C, C)
# --------------------------------------------------------------------------- #
def style_loss_layer(generated, style_gram, compute_dtype=jnp.bfloat16):
    """generated: (N=1, C, H, W); style_gram: (C, C) f32."""
    n, c, h, w = generated.shape
    assert n == 1, "gram_matrix in the reference module assumes batch_size == 1"
    hw = h * w
    scale = 1.0 / (4.0 * (c ** 2) * (hw ** 2))
    x2d = generated.reshape(c, hw).astype(compute_dtype)   # torch .view(C, H*W)
    partial = _partial_grams(x2d)
    return _combine_loss(partial, style_gram, scale)


# --------------------------------------------------------------------------- #
# Module
# --------------------------------------------------------------------------- #
class StyleLoss:
    """JAX/Pallas port of the PyTorch StyleLoss module.

    style_layers are detached constants in the reference module, so their gram
    matrices are precomputed once here (off the critical path) and only the
    generated features are streamed through the loss kernels every forward.
    """

    def __init__(self, style_layers, compute_dtype=jnp.bfloat16):
        self.style_layers = style_layers
        self.compute_dtype = compute_dtype
        items = (style_layers.items() if isinstance(style_layers, dict)
                 else enumerate(style_layers))
        self._style_grams = {}
        for key_, feat in items:
            n, c, h, w = feat.shape
            assert n == 1, "gram_matrix assumes batch_size == 1"
            self._style_grams[key_] = gram_matrix_pallas(
                feat.reshape(c, h * w).astype(compute_dtype))

    def forward(self, generated_layers, style_layer_nums_list):
        style_loss = jnp.float32(0.0)
        for layer_num in style_layer_nums_list:
            style_loss = style_loss + style_loss_layer(
                generated_layers[layer_num], self._style_grams[layer_num],
                self.compute_dtype)
        return style_loss

    __call__ = forward


# --------------------------------------------------------------------------- #
# Pure-JAX references for sanity checking
# --------------------------------------------------------------------------- #
def _reference_style_loss(generated_layers, style_layers, layer_nums,
                          feature_dtype=jnp.float32):
    loss = 0.0
    for ln in layer_nums:
        x = generated_layers[ln]
        y = style_layers[ln]
        _, c, h, w = x.shape
        X = x.reshape(c, h * w).astype(feature_dtype)
        Y = y.reshape(c, h * w).astype(feature_dtype)
        G = jnp.dot(X, X.T, preferred_element_type=jnp.float32)
        S = jnp.dot(Y, Y.T, preferred_element_type=jnp.float32)
        loss = loss + (1.0 / (4 * c ** 2 * (h * w) ** 2)) * jnp.sum((G - S) ** 2)
    return loss


if __name__ == "__main__":
    key = jax.random.PRNGKey(0)
    k1, k2, k3, k4, k5, k6 = jax.random.split(key, 6)

    # Small "VGG-like" feature maps, batch=1 (required by gram_matrix). The
    # three shapes exercise: an even tile split across the two cores (hw=256),
    # an odd tile count with a masked clamped-duplicate tile (hw=128), and a
    # ragged partial edge tile (hw=160).
    generated_layers = [
        jax.random.normal(k1, (1, 4, 16, 16), dtype=jnp.float32),
        jax.random.normal(k2, (1, 8, 16, 8), dtype=jnp.float32),
        jax.random.normal(k3, (1, 8, 20, 8), dtype=jnp.float32),
    ]
    style_layers = [
        jax.random.normal(k4, (1, 4, 16, 16), dtype=jnp.float32),
        jax.random.normal(k5, (1, 8, 16, 8), dtype=jnp.float32),
        jax.random.normal(k6, (1, 8, 20, 8), dtype=jnp.float32),
    ]

    module = StyleLoss(style_layers)
    layer_nums = (0, 1, 2)

    # Jit the whole forward so the per-layer pallas_calls are scheduled together.
    loss_fn = jax.jit(lambda gen: module(gen, layer_nums))
    loss = jax.block_until_ready(loss_fn(generated_layers))

    # 1) Quantization-matched reference (bf16 features, f32 accumulation): tight.
    ref_bf16 = _reference_style_loss(generated_layers, style_layers, layer_nums,
                                     feature_dtype=jnp.bfloat16)
    assert jnp.allclose(loss, ref_bf16, rtol=1e-3, atol=1e-6), (loss, ref_bf16)

    # 2) Full-f32 reference (original PyTorch semantics): loose tolerance for
    #    the deliberate bf16 feature cast (review-endorsed; accumulation is f32).
    ref_f32 = _reference_style_loss(generated_layers, style_layers, layer_nums)
    assert jnp.allclose(loss, ref_f32, rtol=1e-1, atol=1e-4), (loss, ref_f32)

    print("KERNEL_OK")
</pallas_src>

<mosaic_0001>
module attributes {stable_mosaic.version = 11 : i64} {
  func.func @_partial_gram_kernel(%arg0: i32, %arg1: i32, %arg2: memref<4x128xbf16, #tpu.memory_space<vmem>>, %arg3: memref<1x4x4xf32, #tpu.memory_space<vmem>>) attributes {dimension_semantics = [#tpu.dimension_semantics<parallel>, #tpu.dimension_semantics<arbitrary>], iteration_bounds = array<i64: 2, 1>, scalar_prefetch = 0 : i64, scratch_operands = 0 : i64, tpu.core_type = #tpu.core_type<tc>, window_params = [{transform_indices = @transform_0, window_bounds = array<i64: 4, 128>}, {transform_indices = @transform_1, window_bounds = array<i64: 1, 4, 4>}]} {
    %c0_i32 = arith.constant 0 : i32
    %0 = arith.cmpi eq, %arg1, %c0_i32 : i32
    %1 = arith.extui %0 : i1 to i32
    %c0_i32_0 = arith.constant 0 : i32
    %2 = arith.cmpi ne, %1, %c0_i32_0 : i32
    scf.if %2 {
      %cst_8 = arith.constant 0.000000e+00 : f32
      %11 = vector.broadcast %cst_8 : f32 to vector<4x4xf32>
      %c0_9 = arith.constant 0 : index
      %c0_10 = arith.constant 0 : index
      %c0_11 = arith.constant 0 : index
      %12 = vector.load %arg3[%c0_9, %c0_10, %c0_11] : memref<1x4x4xf32, #tpu.memory_space<vmem>>, vector<1x4x4xf32>
      %13 = vector.shape_cast %12 : vector<1x4x4xf32> to vector<4x4xf32>
      %14 = vector.shape_cast %11 : vector<4x4xf32> to vector<1x4x4xf32>
      tpu.vector_store %arg3[%c0_9, %c0_10, %c0_11], %14 {strides = array<i32>} : memref<1x4x4xf32, #tpu.memory_space<vmem>>, vector<1x4x4xf32>,
    } else {
    }
    %c0 = arith.constant 0 : index
    %c0_1 = arith.constant 0 : index
    %3 = vector.load %arg2[%c0, %c0_1] : memref<4x128xbf16, #tpu.memory_space<vmem>>, vector<4x128xbf16>
    %c0_2 = arith.constant 0 : index
    %c0_3 = arith.constant 0 : index
    %c0_4 = arith.constant 0 : index
    %4 = vector.load %arg3[%c0_2, %c0_3, %c0_4] : memref<1x4x4xf32, #tpu.memory_space<vmem>>, vector<1x4x4xf32>
    %5 = vector.shape_cast %4 : vector<1x4x4xf32> to vector<4x4xf32>
    %cst = arith.constant dense<0.000000e+00> : vector<4x4xf32>
    %6 = tpu.matmul %3, %3, %cst {dimension_numbers = #tpu.dot_dimension_numbers<[1], [1], [0], [0], [0, 0, 1, 0], [], []>} : vector<4x128xbf16>, vector<4x128xbf16>, vector<4x4xf32> -> vector<4x4xf32>
    %7 = arith.addf %5, %6 : vector<4x4xf32>
    %c0_5 = arith.constant 0 : index
    %c0_6 = arith.constant 0 : index
    %c0_7 = arith.constant 0 : index
    %8 = vector.load %arg3[%c0_5, %c0_6, %c0_7] : memref<1x4x4xf32, #tpu.memory_space<vmem>>, vector<1x4x4xf32>
    %9 = vector.shape_cast %8 : vector<1x4x4xf32> to vector<4x4xf32>
    %10 = vector.shape_cast %7 : vector<4x4xf32> to vector<1x4x4xf32>
    tpu.vector_store %arg3[%c0_5, %c0_6, %c0_7], %10 {strides = array<i32>} : memref<1x4x4xf32, #tpu.memory_space<vmem>>, vector<1x4x4xf32>,
    return
  }
  func.func @transform_0(%arg0: i32, %arg1: i32) -> (i32, i32) {
    %c1_i32 = arith.constant 1 : i32
    %0 = arith.muli %arg0, %c1_i32 : i32
    %1 = arith.addi %0, %arg1 : i32
    %c1_i32_0 = arith.constant 1 : i32
    %2 = arith.minsi %1, %c1_i32_0 : i32
    %c0_i32 = arith.constant 0 : i32
    %c0_i32_1 = arith.constant 0 : i32
    return %c0_i32, %2 : i32, i32
  }
  func.func @transform_1(%arg0: i32, %arg1: i32) -> (i32, i32, i32) {
    %c0_i32 = arith.constant 0 : i32
    %c0_i32_0 = arith.constant 0 : i32
    %c0_i32_1 = arith.constant 0 : i32
    return %arg0, %c0_i32, %c0_i32_0 : i32, i32, i32
  }
}

</mosaic_0001>

<llo_original>
// kernel: tpu_custom_call.1
$region0: #{tpu_custom_call.1}
  #allocation0 [shape = 'u32[]', space=smem, size = 0x4, offset = 0x4, fixed_abs, tag = 'smem constant byte address 0x4 - core index']
  #allocation1 [shape = 'u32[144,128]{1,0:T(1,128)}', space=vmem, size = 0x12000, scoped, tag = 'internal scratch']
  %s0 = inlined_call_operand.hbm [shape: bf16[4,256], index: 0, kind: input, shape index: {}]
  %s1 = inlined_call_operand.hbm [shape: f32[2,4,4], index: 1, kind: output, shape index: {}]
  %s2 = sld [smem:[#allocation0]]
  $region45: #{tpu_custom_call.1} parent=0
    _
  %s4 = ssub.s32 1, %s2
  %s5 = scalar_select 0, %s4, %s2
  $region1: #{tpu_custom_call.1} parent=0
    #allocation2 [shape = 'u8[2048]{0}', space=vmem, size = 0x800, scoped, tag = 'input window, operand 0']
    #allocation3 [shape = 's32[2]{0}', space=sflag, size = 0x8, scoped, tag = 'scoped memory for tpu_custom_call.1']
    #allocation4 [shape = 's32[2]{0}', space=sflag, size = 0x8, scoped, tag = 'scoped memory for tpu_custom_call.1']
    #allocation5 [shape = 'u8[4096]{0}', space=vmem, size = 0x1000, scoped, tag = 'output window, operand 0']
    %6 = vsyncpa [#allocation3], 0
    %s7 = scalar_lea.sflag [#allocation3], 1
    %8 = vsyncpa %s7, 0
    %9 = vsyncpa [#allocation4], 0
    %s10 = scalar_lea.sflag [#allocation4], 1
    %11 = vsyncpa %s10, 0
    loop: start=0, step=1, limit=4
    $region2: #{tpu_custom_call.1} parent=1 // loop_pre_header
      _
    $region3: #{tpu_custom_call.1} parent=1 // loop_header
      %s13 = sphi 0, %s17
      %p14 = scmp.ge.s32.totalorder %s13, 4
      %s20 = sphi 0, %s32
      %s21 = sphi 0, %s28
      %s22 = sphi 0, %s20
      %s23 = sphi 0, %s21
      %s24 = sphi 0, %s22
      %s25 = sphi 0, %s23
      %s41 = sphi 0, %s43
      %s44 = sphi 0, %s41
      %s45 = sphi 0, %s44
      %s61 = sphi 0, %s45
      %s67 = sphi 0, %s69
      %s70 = sphi 0, %s67
      %s71 = sphi 0, %s70
      %s87 = sphi 0, %s71
    $region4: #{tpu_custom_call.1} parent=1 // loop_header_branch
      %16 = sbr.rel (%p14) target = $region8
    $region5: #{tpu_custom_call.1} parent=1 // loop_body
      %s18 = ssub.s32 %s13, 1
      %s19 = ssub.s32 %s13, 2
      %s26 = sadd.s32 1, %s21
      %p27 = scmp.ge.s32.totalorder %s26, 1
      %s28 = scalar_select %p27, 0, %s26
      %s29 = sadd.s32 1, %s20
      %s30 = scalar_select %p27, %s29, %s20
      %p31 = scmp.ge.s32.totalorder %s30, 2
      %s32 = scalar_select %p31, 0, %s30
      %s33 = sadd.s32 %s20, %s21
      %p34 = scmp.lt.s32.totalorder %s33, 1
      %s35 = scalar_select %p34, %s33, 1
      %s36 = sadd.s32 %s32, %s28
      %p37 = scmp.lt.s32.totalorder %s36, 1
      %s38 = scalar_select %p37, %s36, 1
      %s39 = ssub.s32 %s35, %s38
      %p40 = scmp.eq.s32.totalorder %s39, 0
      %s42 = sadd.s32 %s41, 1
      %s43 = scalar_select %p40, %s41, %s42
      %p46 = pneg %p40
      %p47 = scmp.eq.s32.totalorder %s13, 1
      %p48 = por %p46, %p47
      %p49 = scmp.ne.s32.totalorder %s41, %s44
      %p50 = scmp.eq.s32.totalorder %s13, 0
      %p51 = por %p49, %p50
      %p52 = scmp.ne.s32.totalorder %s41, %s44
      %p53 = scmp.eq.s32.totalorder %s18, 1
      %p54 = por %p52, %p53
      %p55 = scmp.ne.s32.totalorder %s44, %s45
      %p56 = scmp.eq.s32.totalorder %s18, 0
      %p57 = por %p55, %p56
      %p58 = scmp.ne.s32.totalorder %s44, %s45
      %p59 = scmp.eq.s32.totalorder %s19, 1
      %p60 = por %p58, %p59
      %p62 = scmp.ne.s32.totalorder %s45, %s61
      %p63 = scmp.eq.s32.totalorder %s19, 0
      %p64 = por %p62, %p63
      %s65 = ssub.s32 %s20, %s32
      %p66 = scmp.eq.s32.totalorder %s65, 0
      %s68 = sadd.s32 %s67, 1
      %s69 = scalar_select %p66, %s67, %s68
      %p72 = pneg %p66
      %p73 = scmp.eq.s32.totalorder %s13, 1
      %p74 = por %p72, %p73
      %p75 = scmp.ne.s32.totalorder %s67, %s70
      %p76 = scmp.eq.s32.totalorder %s13, 0
      %p77 = por %p75, %p76
      %p78 = scmp.ne.s32.totalorder %s67, %s70
      %p79 = scmp.eq.s32.totalorder %s18, 1
      %p80 = por %p78, %p79
      %p81 = scmp.ne.s32.totalorder %s70, %s71
      %p82 = scmp.eq.s32.totalorder %s18, 0
      %p83 = por %p81, %p82
      %p84 = scmp.ne.s32.totalorder %s70, %s71
      %p85 = scmp.eq.s32.totalorder %s19, 1
      %p86 = por %p84, %p85
      %p88 = scmp.ne.s32.totalorder %s71, %s87
      %p89 = scmp.eq.s32.totalorder %s19, 0
      %p90 = por %p88, %p89
      %p91 = scmp.le.s32.totalorder 1, %s13
      %p92 = scmp.lt.s32.totalorder %s13, 3
      %p93 = pnand %p91, %p92
      %p94 = pneg %p93
      // Predicated region
      $region9: #{tpu_custom_call.1} parent=5 // pred_check
        _
      $region10: #{tpu_custom_call.1} parent=5 // pred_check_branch
        %96 = sbr.rel (%p93) target = $region12
      $region11: #{tpu_custom_call.1} parent=5 // pred_region
        %s97 = ssub.s32 %s13, 1
      $region12: #{tpu_custom_call.1} parent=5 // pred_fallthru
        _
      %p98 = scmp.lt.s32.totalorder %s13, 2
      // Predicated region
      $region13: #{tpu_custom_call.1} parent=5 // pred_check
        %p99 = pneg %p98
      $region14: #{tpu_custom_call.1} parent=5 // pred_check_branch
        %101 = sbr.rel (%p99) target = $region16
      $region15: #{tpu_custom_call.1} parent=5 // pred_region
        // Predicated region
        $region17: #{tpu_custom_call.1} parent=15 // pred_check
          %p102 = pneg %p51
        $region18: #{tpu_custom_call.1} parent=15 // pred_check_branch
          %104 = sbr.rel (%p102) target = $region20
        $region19: #{tpu_custom_call.1} parent=15 // pred_region
          %s105 = sand.u32 %s41, 1
          %s106 = scalar_lea.sflag [#allocation3], %s105
          %s107 = sand.u32 %s41, 1
          %s108 = smul.addr %s107, 2
          %s109 = scalar_lea.vmem [#allocation2], %s108
          %s110 = sadd.s32 %s20, %s21
          %p111 = scmp.lt.s32.totalorder %s110, 1
          %s112 = scalar_select %p111, %s110, 1
          %s114 = ssub.s32 32, 32
          %115 = vsyncadd %s106, %s114
          %s116 = smul.addr %s112, 32
          %s117 = scalar_lea.hbm %s0, %s116
          %s119 = sshll.u32 %s109, 4
          %s120 = int_to_ptr.vmem [resolvable:$true] %s119
          %122 = dma.hbm_to_vmem [thread:$0]  %s117, 32, %s120, %s106
        $region20: #{tpu_custom_call.1} parent=15 // pred_fallthru
          _
      $region16: #{tpu_custom_call.1} parent=5 // pred_fallthru
        _
      %p123 = scmp.le.s32.totalorder 1, %s13
      %p124 = scmp.lt.s32.totalorder %s13, 3
      %p125 = pnand %p123, %p124
      %p126 = pneg %p125
      // Predicated region
      $region21: #{tpu_custom_call.1} parent=5 // pred_check
        _
      $region22: #{tpu_custom_call.1} parent=5 // pred_check_branch
        %128 = sbr.rel (%p125) target = $region24
      $region23: #{tpu_custom_call.1} parent=5 // pred_region
        %s129 = ssub.s32 %s13, 1
        %s130 = sand.u32 %s44, 1
        %s131 = scalar_lea.sflag [#allocation3], %s130
        %s132 = sand.u32 %s44, 1
        %s133 = smul.addr %s132, 2
        %s134 = scalar_lea.vmem [#allocation2], %s133
        // Predicated region
        $region25: #{tpu_custom_call.1} parent=23 // pred_check
          %p135 = pneg %p57
        $region26: #{tpu_custom_call.1} parent=23 // pred_check_branch
          %137 = sbr.rel (%p135) target = $region28
        $region27: #{tpu_custom_call.1} parent=23 // pred_region
          %138 = dma.done %s131, 32
        $region28: #{tpu_custom_call.1} parent=23 // pred_fallthru
          _
        %s139 = sand.u32 %s44, 1
        %s140 = scalar_lea.sflag [#allocation3], %s139
        %s141 = sand.u32 %s44, 1
        %s142 = smul.addr %s141, 2
        %s143 = scalar_lea.vmem [#allocation2], %s142
        %p144 = pneg %p57
        %p145 = pneg %p54
        %p146 = pneg %p83
        %p147 = pneg %p80
        %s148 = sand.u32 %s70, 1
        %s149 = scalar_lea.sflag [#allocation4], %s148
        %s150 = sand.u32 %s70, 1
        %s151 = smul.addr %s150, 4
        %s152 = scalar_lea.vmem [#allocation5], %s151
        %s153 = sadd.s32 %s22, %s23
        %p154 = scmp.lt.s32.totalorder %s153, 1
        %s155 = scalar_select %p154, %s153, 1
        %p157 = scmp.eq.s32.totalorder %s23, 0
        // Predicated region
        $region29: #{tpu_custom_call.1} parent=23 // pred_check
          %p158 = pneg %p157
        $region30: #{tpu_custom_call.1} parent=23 // pred_check_branch
          %160 = sbr.rel (%p158) target = $region32
        $region31: #{tpu_custom_call.1} parent=23 // pred_region
          %vm161 = vcmask 27648
          %162 = vst.msk [vmem:[%s152] sm:$0xf] %vm161, 0.0
        $region32: #{tpu_custom_call.1} parent=23 // pred_fallthru
          _
        %v163 = vld [vmem:[%s134] sm:$0x3]
        %v164 = vld [vmem:[%s152] sm:$0xf]
        %165 = vmatprep.subr.bf16.mxu0 0
        %166 = vmatpush1.bf16.xpose.msra.mxu0 0
        %167 = vmatprep.subr.bf16.mxu0 0
        %168 = vmatpush1.bf16.xpose.msra.mxu0 0
        %169 = vmatprep.subr.bf16.mxu0 0
        %170 = vmatpush1.bf16.xpose.msra.mxu0 0
        %171 = vmatprep.subr.bf16.mxu0 0
        %172 = vmatpush1.bf16.xpose.msra.mxu0 0
        %173 = vmatprep.subr.bf16.mxu0 0
        %174 = vmatpush1.bf16.xpose.msra.mxu0 0
        %175 = vmatprep.subr.bf16.mxu0 0
        %176 = vmatpush1.bf16.xpose.msra.mxu0 0
        %177 = vmatprep.subr.bf16.mxu0 0
        %178 = vmatpush1.bf16.xpose.msra.mxu0 0
        %179 = vmatprep.subr.bf16.mxu0 0
        %180 = vmatpush1.bf16.xpose.msra.mxu0 %v163
        %181 = vmatprep.subr.bf16.mxu0 0
        %182 = vmatpush2.bf16.xpose.msra.mxu0 0
        %183 = vmatprep.subr.bf16.mxu0 0
        %184 = vmatpush2.bf16.xpose.msra.mxu0 0
        %185 = vmatprep.subr.bf16.mxu0 0
        %186 = vmatpush2.bf16.xpose.msra.mxu0 0
        %187 = vmatprep.subr.bf16.mxu0 0
        %188 = vmatpush2.bf16.xpose.msra.mxu0 0
        %189 = vmatprep.subr.bf16.mxu0 0
        %190 = vmatpush2.bf16.xpose.msra.mxu0 0
        %191 = vmatprep.subr.bf16.mxu0 0
        %192 = vmatpush2.bf16.xpose.msra.mxu0 0
        %193 = vmatprep.subr.bf16.mxu0 0
        %194 = vmatpush2.bf16.xpose.msra.mxu0 0
        %195 = vmatprep.subr.bf16.mxu0 0
        %196 = vmatpush2.bf16.xpose.msra.mxu0 0
        %197 = vmatprep.mubr.bf16.mxu0 0
        %198 = vmatmul.mubr.bf16.gmra.mxu0 %v163
        %v199 = vpop.f32.mrf.mxu0
        %v200 = vadd.f32 0.0, %v199
        %v201 = vpop.f32.mrf.mxu0
        %v202 = vpop.f32.mrf.mxu0
        %v203 = vpop.f32.mrf.mxu0
        %204 = vdwg.mxu0
        %v205 = vadd.f32 %v164, %v200
        %vm206 = vcmask 27648
        %207 = vst.msk [vmem:[%s152] sm:$0xf] %vm206, %v205
        %s208 = sand.u32 %s70, 1
        %s209 = scalar_lea.sflag [#allocation4], %s208
        %s210 = sand.u32 %s70, 1
        %s211 = smul.addr %s210, 4
        %s212 = scalar_lea.vmem [#allocation5], %s211
        // Predicated region
        $region33: #{tpu_custom_call.1} parent=23 // pred_check
          %p213 = pneg %p80
        $region34: #{tpu_custom_call.1} parent=23 // pred_check_branch
          %215 = sbr.rel (%p213) target = $region36
        $region35: #{tpu_custom_call.1} parent=23 // pred_region
          %s217 = ssub.s32 64, 64
          %218 = vsyncadd %s209, %s217
          %s219 = smul.addr %s22, 64
          %s220 = scalar_lea.hbm %s1, %s219
          %s222 = sshll.u32 %s212, 4
          %s223 = int_to_ptr.vmem [resolvable:$true] %s222
          %225 = dma.vmem_to_hbm [thread:$0]  %s223, 64, %s220, %s209
        $region36: #{tpu_custom_call.1} parent=23 // pred_fallthru
          _
      $region24: #{tpu_custom_call.1} parent=5 // pred_fallthru
        _
      %p226 = scmp.le.s32.totalorder 2, %s13
      // Predicated region
      $region37: #{tpu_custom_call.1} parent=5 // pred_check
        %p227 = pneg %p226
      $region38: #{tpu_custom_call.1} parent=5 // pred_check_branch
        %229 = sbr.rel (%p227) target = $region40
      $region39: #{tpu_custom_call.1} parent=5 // pred_region
        %s230 = ssub.s32 %s13, 2
        // Predicated region
        $region41: #{tpu_custom_call.1} parent=39 // pred_check
          %p231 = pneg %p86
        $region42: #{tpu_custom_call.1} parent=39 // pred_check_branch
          %233 = sbr.rel (%p231) target = $region44
        $region43: #{tpu_custom_call.1} parent=39 // pred_region
          %s234 = sand.u32 %s71, 1
          %s235 = scalar_lea.sflag [#allocation4], %s234
          %s236 = sand.u32 %s71, 1
          %s237 = smul.addr %s236, 4
          %s238 = scalar_lea.vmem [#allocation5], %s237
          %239 = dma.done %s235, 64
        $region44: #{tpu_custom_call.1} parent=39 // pred_fallthru
          _
      $region40: #{tpu_custom_call.1} parent=5 // pred_fallthru
        _
    $region6: #{tpu_custom_call.1} parent=1 // loop_footer
      %s17 = sadd.s32 1, %s13
    $region7: #{tpu_custom_call.1} parent=1 // loop_footer_branch
      %12 = sbr.rel target = $region3
    $region8: #{tpu_custom_call.1} parent=1 // loop_exit
      _
    %240 = vsyncpa [#allocation3], 1
    %s241 = scalar_lea.sflag [#allocation3], 1
    %242 = vsyncpa %s241, 1
    %243 = vsyncpa [#allocation4], 1
    %s244 = scalar_lea.sflag [#allocation4], 1
    %245 = vsyncpa %s244, 1

</llo_original>
